<compile_context>
chip_gen: v7x
topology: tpu7x:2x2x1
jax: 0.10.0
libtpu: 0.0.40
codegen_flags: <defaults>
</compile_context>

<pallas_src>
import functools

import jax
import jax.numpy as jnp
from jax.experimental import pallas as pl
from jax.experimental.pallas import tpu as pltpu


# --------------------------- in-kernel helpers -------------------------------
def _shift_lanes(z, off, length):
    """s[:, f] = z[:, f + off] for 0 <= f + off < length, zero elsewhere.

    `off` is a static Python int; this is a static lane slice + zero fill,
    lowering to an XLU lane shift (equivalent to pltpu.roll + masking) -- no
    sublane-misaligned slices, no relayout copies of 2-D spatial tiles.
    """
    if off == 0:
        return z
    c = z.shape[0]
    if off > 0:
        return jnp.concatenate(
            [z[:, off:], jnp.zeros((c, off), z.dtype)], axis=1)
    return jnp.concatenate(
        [jnp.zeros((c, -off), z.dtype), z[:, :length + off]], axis=1)


# ----------------------------- Pallas kernel ---------------------------------
def fused_downsample_kernel(alpha_ref, xs_ref, mask_ref, w1_ref, b1_ref,
                            w2_ref, b2_ref, o_ref, *, Wo, HW):
    """Fused PReLU -> conv(3x3,s2) -> PReLU -> conv(3x3,s1) for one image.

    alpha_ref: (2,) SMEM              PReLU slopes (nn.PReLU() shared scalars)
    xs_ref   : (1, 4*Cin, HW)         2x2 space-to-depth of x, channel-major,
                                      spatial flattened on the lane axis
    mask_ref : (9, HW)                boundary masks, index (dy+1)*3 + (dx+1)
    w1_ref   : (Cout, 16*Cin)         stride-2 conv folded to 2x2-tap weights
    b1_ref   : (Cout, 1)
    w2_ref   : (Cout, 9*Cout)         3x3 conv weights, cols ordered (dy, dx, ci)
    b2_ref   : (Cout, 1)
    o_ref    : (1, Cout, HW)          NCHW-flat output (lane-dense store)
    """
    a1 = alpha_ref[0]
    a2 = alpha_ref[1]

    def tap(z, dy, dx):
        # Shifted operand; padding handled by the precomputed boundary mask.
        s = _shift_lanes(z, dy * Wo + dx, HW)
        if dy == 0 and dx == 0:
            return s
        m = (dy + 1) * 3 + (dx + 1)
        return s * mask_ref[m:m + 1, :]          # (1, HW) broadcast over rows

    # ---------------- stage 1: PReLU + 3x3 stride-2 conv --------------------
    xs = xs_ref[0]                               # (4*Cin, HW)
    xs = jnp.where(xs >= 0.0, xs, a1 * xs)       # PReLU (pure permutation of x)

    slab1 = jnp.concatenate(                     # (16*Cin, HW): one MXU push
        [tap(xs, dy, dx) for dy in (-1, 0) for dx in (-1, 0)], axis=0)
    y1 = jnp.dot(w1_ref[...], slab1,
                 preferred_element_type=jnp.float32) + b1_ref[...]
    y1 = jnp.where(y1 >= 0.0, y1, a2 * y1)       # (Cout, HW) stays in VMEM/vregs

    # ---------------- stage 2: 3x3 stride-1 conv ----------------------------
    slab2 = jnp.concatenate(                     # (9*Cout, HW): one MXU push
        [tap(y1, dy, dx) for dy in (-1, 0, 1) for dx in (-1, 0, 1)], axis=0)
    y2 = jnp.dot(w2_ref[...], slab2,
                 preferred_element_type=jnp.float32) + b2_ref[...]

    o_ref[0] = y2.astype(o_ref.dtype)            # lane-dense (Cout, HW) store


# ------------------------- weight / mask re-layouts --------------------------
def _fold_w1(w1):
    """(Cout, Cin, 3, 3) stride-2 weights -> (Cout, 16*Cin) weights of the
    equivalent 2x2 stride-1 conv over the unpadded 2x2 space-to-depth input.
    Column order: ((dy+1)*2 + (dx+1))*4*Cin + (py*2 + px)*Cin + ci."""
    Cout, Cin, _, _ = w1.shape
    wk = jnp.transpose(w1, (0, 2, 3, 1))               # (o, ky, kx, ci)
    wk = jnp.pad(wk, ((0, 0), (1, 0), (1, 0), (0, 0)))  # zero row/col at FRONT
    wk = wk.reshape(Cout, 2, 2, 2, 2, Cin)              # (o, dyi, py, dxi, px, ci)
    wk = jnp.transpose(wk, (0, 1, 3, 2, 4, 5))          # (o, dyi, dxi, py, px, ci)
    return wk.reshape(Cout, 16 * Cin)


def _fold_w2(w2):
    """(Cout, Ci, 3, 3) -> (Cout, 9*Ci), columns ordered (dy, dx, ci)."""
    Cout, Ci, _, _ = w2.shape
    return jnp.transpose(w2, (0, 2, 3, 1)).reshape(Cout, 9 * Ci)


def _boundary_masks(Ho, Wo):
    """(9, Ho*Wo) f32: mask[(dy+1)*3+(dx+1), y*Wo+x] = 1 iff (y+dy, x+dx) is
    inside the (Ho, Wo) image (i.e. the tap does not read conv padding)."""
    yy, xx = jnp.meshgrid(jnp.arange(Ho), jnp.arange(Wo), indexing="ij")
    rows = []
    for dy in (-1, 0, 1):
        for dx in (-1, 0, 1):
            ok = ((yy + dy >= 0) & (yy + dy < Ho) &
                  (xx + dx >= 0) & (xx + dx < Wo))
            rows.append(ok.reshape(-1))
    return jnp.stack(rows).astype(jnp.float32)


# --------------------------------- wrapper ------------------------------------
@jax.jit
def downsampling_block(x_nchw, params):
    N, Cin, H, W = x_nchw.shape
    assert H % 2 == 0 and W % 2 == 0, "stride-2 block expects even spatial dims"
    Cout = params["w1"].shape[0]
    Ho, Wo = H // 2, W // 2
    HW = Ho * Wo

    # Unpadded 2x2 space-to-depth, channel-major (NCHW is already channel-major,
    # so this is a single transpose pass; no NHWC pass, no padded HBM copy).
    xs = x_nchw.reshape(N, Cin, Ho, 2, Wo, 2)
    xs = jnp.transpose(xs, (0, 3, 5, 1, 2, 4))       # (N, py, px, ci, Y, X)
    xs = xs.reshape(N, 4 * Cin, HW)

    masks = _boundary_masks(Ho, Wo)                  # (9, HW), resident
    w1s = _fold_w1(params["w1"]).astype(jnp.float32)  # (Cout, 16*Cin)
    w2s = _fold_w2(params["w2"]).astype(jnp.float32)  # (Cout, 9*Cout)
    b1 = params["b1"].reshape(Cout, 1).astype(jnp.float32)
    b2 = params["b2"].reshape(Cout, 1).astype(jnp.float32)
    alphas = jnp.concatenate([params["a1"].reshape(-1)[:1],
                              params["a2"].reshape(-1)[:1]]).astype(jnp.float32)

    kernel = functools.partial(fused_downsample_kernel, Wo=Wo, HW=HW)

    out = pl.pallas_call(
        kernel,
        out_shape=jax.ShapeDtypeStruct((N, Cout, HW), jnp.float32),
        grid=(N,),                                   # one image per grid step
        in_specs=[
            pl.BlockSpec(memory_space=pltpu.MemorySpace.SMEM),              # alphas
            pl.BlockSpec((1, 4 * Cin, HW), lambda n: (n, 0, 0)),            # xs
            pl.BlockSpec((9, HW), lambda n: (0, 0)),                        # masks
            pl.BlockSpec((Cout, 16 * Cin), lambda n: (0, 0)),               # w1
            pl.BlockSpec((Cout, 1), lambda n: (0, 0)),                      # b1
            pl.BlockSpec((Cout, 9 * Cout), lambda n: (0, 0)),               # w2
            pl.BlockSpec((Cout, 1), lambda n: (0, 0)),                      # b2
        ],
        out_specs=pl.BlockSpec((1, Cout, HW), lambda n: (n, 0, 0)),
        compiler_params=pltpu.CompilerParams(
            dimension_semantics=("parallel",),
            vmem_limit_bytes=32 * 1024 * 1024),
    )(alphas, xs, masks, w1s, b1, w2s, b2)

    # Output is already NCHW-flat: pure (free) reshape, no transpose pass.
    return out.reshape(N, Cout, Ho, Wo)


# --------------------------------- reference ----------------------------------
def ref_forward(x, params):
    a1 = params["a1"][0]
    h = jnp.where(x >= 0, x, a1 * x)
    h = jax.lax.conv_general_dilated(
        h, params["w1"], (2, 2), ((1, 1), (1, 1)),
        dimension_numbers=("NCHW", "OIHW", "NCHW"),
        precision=jax.lax.Precision.HIGHEST) + params["b1"][None, :, None, None]
    a2 = params["a2"][0]
    h = jnp.where(h >= 0, h, a2 * h)
    h = jax.lax.conv_general_dilated(
        h, params["w2"], (1, 1), ((1, 1), (1, 1)),
        dimension_numbers=("NCHW", "OIHW", "NCHW"),
        precision=jax.lax.Precision.HIGHEST) + params["b2"][None, :, None, None]
    return h


# ----------------------------------- main --------------------------------------
if __name__ == "__main__":
    key = jax.random.PRNGKey(0)
    ch_in, ch_out = 4, 8
    N, H, W = 2, 16, 16

    k1, k2, k3, k4, k5 = jax.random.split(key, 5)
    x = jax.random.normal(k1, (N, ch_in, H, W), jnp.float32)

    params = {
        # nn.PReLU() default: single shared slope initialized to 0.25.
        # (A per-channel nn.PReLU(num_parameters=C) would need a (C,1) slope.)
        "a1": jnp.full((1,), 0.25, jnp.float32),
        "a2": jnp.full((1,), 0.25, jnp.float32),
        "w1": 0.1 * jax.random.normal(k2, (ch_out, ch_in, 3, 3), jnp.float32),
        "b1": 0.1 * jax.random.normal(k3, (ch_out,), jnp.float32),
        "w2": 0.1 * jax.random.normal(k4, (ch_out, ch_out, 3, 3), jnp.float32),
        "b2": 0.1 * jax.random.normal(k5, (ch_out,), jnp.float32),
    }

    out = jax.block_until_ready(downsampling_block(x, params))
    ref = jax.block_until_ready(ref_forward(x, params))

    assert out.shape == (N, ch_out, H // 2, W // 2), out.shape
    err = float(jnp.max(jnp.abs(out - ref)))
    if err < 2e-3:
        print("KERNEL_OK")
    else:
        print(f"MISMATCH max_abs_err={err}")
</pallas_src>

<mosaic_0001>
module attributes {stable_mosaic.version = 11 : i64} {
  func.func @fused_downsample_kernel(%arg0: i32, %arg1: memref<2xf32, #tpu.memory_space<smem>>, %arg2: memref<1x16x64xf32, #tpu.memory_space<vmem>>, %arg3: memref<9x64xf32, #tpu.memory_space<vmem>>, %arg4: memref<8x64xf32, #tpu.memory_space<vmem>>, %arg5: memref<8x1xf32, #tpu.memory_space<vmem>>, %arg6: memref<8x72xf32, #tpu.memory_space<vmem>>, %arg7: memref<8x1xf32, #tpu.memory_space<vmem>>, %arg8: memref<1x8x64xf32, #tpu.memory_space<vmem>>) attributes {dimension_semantics = [#tpu.dimension_semantics<parallel>], iteration_bounds = array<i64: 2>, scalar_prefetch = 0 : i64, scratch_operands = 0 : i64, tpu.core_type = #tpu.core_type<tc>, window_params = [{transform_indices = @transform_0, window_bounds = array<i64: 2>}, {transform_indices = @transform_1, window_bounds = array<i64: 1, 16, 64>}, {pipeline_mode = #tpu.pipeline_mode<synchronous>, transform_indices = @transform_2, window_bounds = array<i64: 9, 64>}, {pipeline_mode = #tpu.pipeline_mode<synchronous>, transform_indices = @transform_3, window_bounds = array<i64: 8, 64>}, {pipeline_mode = #tpu.pipeline_mode<synchronous>, transform_indices = @transform_4, window_bounds = array<i64: 8, 1>}, {pipeline_mode = #tpu.pipeline_mode<synchronous>, transform_indices = @transform_5, window_bounds = array<i64: 8, 72>}, {pipeline_mode = #tpu.pipeline_mode<synchronous>, transform_indices = @transform_6, window_bounds = array<i64: 8, 1>}, {transform_indices = @transform_7, window_bounds = array<i64: 1, 8, 64>}]} {
    %c0 = arith.constant 0 : index
    %0 = memref.load %arg1[%c0] : memref<2xf32, #tpu.memory_space<smem>>
    %c1 = arith.constant 1 : index
    %1 = memref.load %arg1[%c1] : memref<2xf32, #tpu.memory_space<smem>>
    %c0_0 = arith.constant 0 : index
    %c0_1 = arith.constant 0 : index
    %c0_2 = arith.constant 0 : index
    %2 = vector.load %arg2[%c0_0, %c0_1, %c0_2] : memref<1x16x64xf32, #tpu.memory_space<vmem>>, vector<1x16x64xf32>
    %3 = vector.shape_cast %2 : vector<1x16x64xf32> to vector<16x64xf32>
    %cst = arith.constant 0.000000e+00 : f32
    %4 = vector.broadcast %cst : f32 to vector<16x64xf32>
    %5 = arith.cmpf oge, %3, %4 : vector<16x64xf32>
    %6 = vector.broadcast %0 : f32 to vector<16x64xf32>
    %7 = arith.mulf %6, %3 : vector<16x64xf32>
    %8 = arith.select %5, %3, %7 : vector<16x64xi1>, vector<16x64xf32>
    %cst_3 = arith.constant 0.000000e+00 : f32
    %9 = vector.broadcast %cst_3 : f32 to vector<16x9xf32>
    %10 = vector.extract_strided_slice %8 {offsets = [0, 0], sizes = [16, 55], strides = [1, 1]} : vector<16x64xf32> to vector<16x55xf32>
    %11 = tpu.concatenate %9, %10 in 1 : vector<16x9xf32>, vector<16x55xf32> -> vector<16x64xf32>
    %c0_4 = arith.constant 0 : index
    %c0_5 = arith.constant 0 : index
    %12 = vector.load %arg3[%c0_4, %c0_5] : memref<9x64xf32, #tpu.memory_space<vmem>>, vector<1x64xf32>
    %13 = vector.broadcast %12 : vector<1x64xf32> to vector<16x64xf32>
    %14 = arith.mulf %11, %13 : vector<16x64xf32>
    %cst_6 = arith.constant 0.000000e+00 : f32
    %15 = vector.broadcast %cst_6 : f32 to vector<16x8xf32>
    %16 = vector.extract_strided_slice %8 {offsets = [0, 0], sizes = [16, 56], strides = [1, 1]} : vector<16x64xf32> to vector<16x56xf32>
    %17 = tpu.concatenate %15, %16 in 1 : vector<16x8xf32>, vector<16x56xf32> -> vector<16x64xf32>
    %c1_7 = arith.constant 1 : index
    %c0_8 = arith.constant 0 : index
    %18 = vector.load %arg3[%c1_7, %c0_8] : memref<9x64xf32, #tpu.memory_space<vmem>>, vector<1x64xf32>
    %19 = vector.broadcast %18 : vector<1x64xf32> to vector<16x64xf32>
    %20 = arith.mulf %17, %19 : vector<16x64xf32>
    %cst_9 = arith.constant 0.000000e+00 : f32
    %21 = vector.broadcast %cst_9 : f32 to vector<16x1xf32>
    %22 = vector.extract_strided_slice %8 {offsets = [0, 0], sizes = [16, 63], strides = [1, 1]} : vector<16x64xf32> to vector<16x63xf32>
    %23 = tpu.concatenate %21, %22 in 1 : vector<16x1xf32>, vector<16x63xf32> -> vector<16x64xf32>
    %c3 = arith.constant 3 : index
    %c0_10 = arith.constant 0 : index
    %24 = vector.load %arg3[%c3, %c0_10] : memref<9x64xf32, #tpu.memory_space<vmem>>, vector<1x64xf32>
    %25 = vector.broadcast %24 : vector<1x64xf32> to vector<16x64xf32>
    %26 = arith.mulf %23, %25 : vector<16x64xf32>
    %27 = tpu.concatenate %14, %20, %26, %8 in 0 : vector<16x64xf32>, vector<16x64xf32>, vector<16x64xf32>, vector<16x64xf32> -> vector<64x64xf32>
    %c0_11 = arith.constant 0 : index
    %c0_12 = arith.constant 0 : index
    %28 = vector.load %arg4[%c0_11, %c0_12] : memref<8x64xf32, #tpu.memory_space<vmem>>, vector<8x64xf32>
    %cst_13 = arith.constant dense<0.000000e+00> : vector<8x64xf32>
    %29 = tpu.matmul %28, %27, %cst_13 {dimension_numbers = #tpu.dot_dimension_numbers<[1], [0], [0], [1], [0, 0, 1, 1], [], []>} : vector<8x64xf32>, vector<64x64xf32>, vector<8x64xf32> -> vector<8x64xf32>
    %c0_14 = arith.constant 0 : index
    %c0_15 = arith.constant 0 : index
    %30 = vector.load %arg5[%c0_14, %c0_15] : memref<8x1xf32, #tpu.memory_space<vmem>>, vector<8x1xf32>
    %31 = vector.broadcast %30 : vector<8x1xf32> to vector<8x64xf32>
    %32 = arith.addf %29, %31 : vector<8x64xf32>
    %cst_16 = arith.constant 0.000000e+00 : f32
    %33 = vector.broadcast %cst_16 : f32 to vector<8x64xf32>
    %34 = arith.cmpf oge, %32, %33 : vector<8x64xf32>
    %35 = vector.broadcast %1 : f32 to vector<8x64xf32>
    %36 = arith.mulf %35, %32 : vector<8x64xf32>
    %37 = arith.select %34, %32, %36 : vector<8x64xi1>, vector<8x64xf32>
    %cst_17 = arith.constant 0.000000e+00 : f32
    %38 = vector.broadcast %cst_17 : f32 to vector<8x9xf32>
    %39 = vector.extract_strided_slice %37 {offsets = [0, 0], sizes = [8, 55], strides = [1, 1]} : vector<8x64xf32> to vector<8x55xf32>
    %40 = tpu.concatenate %38, %39 in 1 : vector<8x9xf32>, vector<8x55xf32> -> vector<8x64xf32>
    %c0_18 = arith.constant 0 : index
    %c0_19 = arith.constant 0 : index
    %41 = vector.load %arg3[%c0_18, %c0_19] : memref<9x64xf32, #tpu.memory_space<vmem>>, vector<1x64xf32>
    %42 = vector.broadcast %41 : vector<1x64xf32> to vector<8x64xf32>
    %43 = arith.mulf %40, %42 : vector<8x64xf32>
    %cst_20 = arith.constant 0.000000e+00 : f32
    %44 = vector.broadcast %cst_20 : f32 to vector<8x8xf32>
    %45 = vector.extract_strided_slice %37 {offsets = [0, 0], sizes = [8, 56], strides = [1, 1]} : vector<8x64xf32> to vector<8x56xf32>
    %46 = tpu.concatenate %44, %45 in 1 : vector<8x8xf32>, vector<8x56xf32> -> vector<8x64xf32>
    %c1_21 = arith.constant 1 : index
    %c0_22 = arith.constant 0 : index
    %47 = vector.load %arg3[%c1_21, %c0_22] : memref<9x64xf32, #tpu.memory_space<vmem>>, vector<1x64xf32>
    %48 = vector.broadcast %47 : vector<1x64xf32> to vector<8x64xf32>
    %49 = arith.mulf %46, %48 : vector<8x64xf32>
    %cst_23 = arith.constant 0.000000e+00 : f32
    %50 = vector.broadcast %cst_23 : f32 to vector<8x7xf32>
    %51 = vector.extract_strided_slice %37 {offsets = [0, 0], sizes = [8, 57], strides = [1, 1]} : vector<8x64xf32> to vector<8x57xf32>
    %52 = tpu.concatenate %50, %51 in 1 : vector<8x7xf32>, vector<8x57xf32> -> vector<8x64xf32>
    %c2 = arith.constant 2 : index
    %c0_24 = arith.constant 0 : index
    %53 = vector.load %arg3[%c2, %c0_24] : memref<9x64xf32, #tpu.memory_space<vmem>>, vector<1x64xf32>
    %54 = vector.broadcast %53 : vector<1x64xf32> to vector<8x64xf32>
    %55 = arith.mulf %52, %54 : vector<8x64xf32>
    %cst_25 = arith.constant 0.000000e+00 : f32
    %56 = vector.broadcast %cst_25 : f32 to vector<8x1xf32>
    %57 = vector.extract_strided_slice %37 {offsets = [0, 0], sizes = [8, 63], strides = [1, 1]} : vector<8x64xf32> to vector<8x63xf32>
    %58 = tpu.concatenate %56, %57 in 1 : vector<8x1xf32>, vector<8x63xf32> -> vector<8x64xf32>
    %c3_26 = arith.constant 3 : index
    %c0_27 = arith.constant 0 : index
    %59 = vector.load %arg3[%c3_26, %c0_27] : memref<9x64xf32, #tpu.memory_space<vmem>>, vector<1x64xf32>
    %60 = vector.broadcast %59 : vector<1x64xf32> to vector<8x64xf32>
    %61 = arith.mulf %58, %60 : vector<8x64xf32>
    %62 = vector.extract_strided_slice %37 {offsets = [0, 1], sizes = [8, 63], strides = [1, 1]} : vector<8x64xf32> to vector<8x63xf32>
    %cst_28 = arith.constant 0.000000e+00 : f32
    %63 = vector.broadcast %cst_28 : f32 to vector<8x1xf32>
    %64 = tpu.concatenate %62, %63 in 1 : vector<8x63xf32>, vector<8x1xf32> -> vector<8x64xf32>
    %c5 = arith.constant 5 : index
    %c0_29 = arith.constant 0 : index
    %65 = vector.load %arg3[%c5, %c0_29] : memref<9x64xf32, #tpu.memory_space<vmem>>, vector<1x64xf32>
    %66 = vector.broadcast %65 : vector<1x64xf32> to vector<8x64xf32>
    %67 = arith.mulf %64, %66 : vector<8x64xf32>
    %68 = vector.extract_strided_slice %37 {offsets = [0, 7], sizes = [8, 57], strides = [1, 1]} : vector<8x64xf32> to vector<8x57xf32>
    %cst_30 = arith.constant 0.000000e+00 : f32
    %69 = vector.broadcast %cst_30 : f32 to vector<8x7xf32>
    %70 = tpu.concatenate %68, %69 in 1 : vector<8x57xf32>, vector<8x7xf32> -> vector<8x64xf32>
    %c6 = arith.constant 6 : index
    %c0_31 = arith.constant 0 : index
    %71 = vector.load %arg3[%c6, %c0_31] : memref<9x64xf32, #tpu.memory_space<vmem>>, vector<1x64xf32>
    %72 = vector.broadcast %71 : vector<1x64xf32> to vector<8x64xf32>
    %73 = arith.mulf %70, %72 : vector<8x64xf32>
    %74 = vector.extract_strided_slice %37 {offsets = [0, 8], sizes = [8, 56], strides = [1, 1]} : vector<8x64xf32> to vector<8x56xf32>
    %cst_32 = arith.constant 0.000000e+00 : f32
    %75 = vector.broadcast %cst_32 : f32 to vector<8x8xf32>
    %76 = tpu.concatenate %74, %75 in 1 : vector<8x56xf32>, vector<8x8xf32> -> vector<8x64xf32>
    %c7 = arith.constant 7 : index
    %c0_33 = arith.constant 0 : index
    %77 = vector.load %arg3[%c7, %c0_33] : memref<9x64xf32, #tpu.memory_space<vmem>>, vector<1x64xf32>
    %78 = vector.broadcast %77 : vector<1x64xf32> to vector<8x64xf32>
    %79 = arith.mulf %76, %78 : vector<8x64xf32>
    %80 = vector.extract_strided_slice %37 {offsets = [0, 9], sizes = [8, 55], strides = [1, 1]} : vector<8x64xf32> to vector<8x55xf32>
    %cst_34 = arith.constant 0.000000e+00 : f32
    %81 = vector.broadcast %cst_34 : f32 to vector<8x9xf32>
    %82 = tpu.concatenate %80, %81 in 1 : vector<8x55xf32>, vector<8x9xf32> -> vector<8x64xf32>
    %c8 = arith.constant 8 : index
    %c0_35 = arith.constant 0 : index
    %83 = vector.load %arg3[%c8, %c0_35] : memref<9x64xf32, #tpu.memory_space<vmem>>, vector<1x64xf32>
    %84 = vector.broadcast %83 : vector<1x64xf32> to vector<8x64xf32>
    %85 = arith.mulf %82, %84 : vector<8x64xf32>
    %86 = tpu.concatenate %43, %49, %55, %61, %37, %67, %73, %79, %85 in 0 : vector<8x64xf32>, vector<8x64xf32>, vector<8x64xf32>, vector<8x64xf32>, vector<8x64xf32>, vector<8x64xf32>, vector<8x64xf32>, vector<8x64xf32>, vector<8x64xf32> -> vector<72x64xf32>
    %c0_36 = arith.constant 0 : index
    %c0_37 = arith.constant 0 : index
    %87 = vector.load %arg6[%c0_36, %c0_37] : memref<8x72xf32, #tpu.memory_space<vmem>>, vector<8x72xf32>
    %cst_38 = arith.constant dense<0.000000e+00> : vector<8x64xf32>
    %88 = tpu.matmul %87, %86, %cst_38 {dimension_numbers = #tpu.dot_dimension_numbers<[1], [0], [0], [1], [0, 0, 1, 1], [], []>} : vector<8x72xf32>, vector<72x64xf32>, vector<8x64xf32> -> vector<8x64xf32>
    %c0_39 = arith.constant 0 : index
    %c0_40 = arith.constant 0 : index
    %89 = vector.load %arg7[%c0_39, %c0_40] : memref<8x1xf32, #tpu.memory_space<vmem>>, vector<8x1xf32>
    %90 = vector.broadcast %89 : vector<8x1xf32> to vector<8x64xf32>
    %91 = arith.addf %88, %90 : vector<8x64xf32>
    %c0_41 = arith.constant 0 : index
    %c0_42 = arith.constant 0 : index
    %c0_43 = arith.constant 0 : index
    %92 = vector.load %arg8[%c0_41, %c0_42, %c0_43] : memref<1x8x64xf32, #tpu.memory_space<vmem>>, vector<1x8x64xf32>
    %93 = vector.shape_cast %92 : vector<1x8x64xf32> to vector<8x64xf32>
    %94 = vector.shape_cast %91 : vector<8x64xf32> to vector<1x8x64xf32>
    tpu.vector_store %arg8[%c0_41, %c0_42, %c0_43], %94 {strides = array<i32>} : memref<1x8x64xf32, #tpu.memory_space<vmem>>, vector<1x8x64xf32>,
    return
  }
  func.func @transform_0(%arg0: i32) -> i32 {
    %c0_i32 = arith.constant 0 : i32
    %c0_i32_0 = arith.constant 0 : i32
    return %c0_i32 : i32
  }
  func.func @transform_1(%arg0: i32) -> (i32, i32, i32) {
    %c0_i32 = arith.constant 0 : i32
    %c0_i32_0 = arith.constant 0 : i32
    %c0_i32_1 = arith.constant 0 : i32
    return %arg0, %c0_i32, %c0_i32_0 : i32, i32, i32
  }
  func.func @transform_2(%arg0: i32) -> (i32, i32) {
    %c0_i32 = arith.constant 0 : i32
    %c0_i32_0 = arith.constant 0 : i32
    %c0_i32_1 = arith.constant 0 : i32
    return %c0_i32, %c0_i32_0 : i32, i32
  }
  func.func @transform_3(%arg0: i32) -> (i32, i32) {
    %c0_i32 = arith.constant 0 : i32
    %c0_i32_0 = arith.constant 0 : i32
    %c0_i32_1 = arith.constant 0 : i32
    return %c0_i32, %c0_i32_0 : i32, i32
  }
  func.func @transform_4(%arg0: i32) -> (i32, i32) {
    %c0_i32 = arith.constant 0 : i32
    %c0_i32_0 = arith.constant 0 : i32
    %c0_i32_1 = arith.constant 0 : i32
    return %c0_i32, %c0_i32_0 : i32, i32
  }
  func.func @transform_5(%arg0: i32) -> (i32, i32) {
    %c0_i32 = arith.constant 0 : i32
    %c0_i32_0 = arith.constant 0 : i32
    %c0_i32_1 = arith.constant 0 : i32
    return %c0_i32, %c0_i32_0 : i32, i32
  }
  func.func @transform_6(%arg0: i32) -> (i32, i32) {
    %c0_i32 = arith.constant 0 : i32
    %c0_i32_0 = arith.constant 0 : i32
    %c0_i32_1 = arith.constant 0 : i32
    return %c0_i32, %c0_i32_0 : i32, i32
  }
  func.func @transform_7(%arg0: i32) -> (i32, i32, i32) {
    %c0_i32 = arith.constant 0 : i32
    %c0_i32_0 = arith.constant 0 : i32
    %c0_i32_1 = arith.constant 0 : i32
    return %arg0, %c0_i32, %c0_i32_0 : i32, i32, i32
  }
}

</mosaic_0001>

<llo_original>
// kernel: downsampling_block.1
$region0: #{downsampling_block.1}
  #allocation0 [shape = 'u32[]', space=smem, size = 0x4, offset = 0x4, fixed_abs, tag = 'smem constant byte address 0x4 - core index']
  #allocation1 [shape = 'u32[144,128]{1,0:T(1,128)}', space=vmem, size = 0x12000, scoped, tag = 'internal scratch']
  %s0 = inlined_call_operand.vmem [shape: f32[2], index: 0, kind: input, shape index: {}]
  %s1 = inlined_call_operand.vmem [shape: f32[2,16,64], index: 1, kind: input, shape index: {}]
  %s2 = inlined_call_operand.vmem [shape: f32[9,64], index: 2, kind: input, shape index: {}]
  %s3 = inlined_call_operand.vmem [shape: f32[8,64], index: 3, kind: input, shape index: {}]
  %s4 = inlined_call_operand.vmem [shape: f32[8,1], index: 4, kind: input, shape index: {}]
  %s5 = inlined_call_operand.vmem [shape: f32[8,72], index: 5, kind: input, shape index: {}]
  %s6 = inlined_call_operand.vmem [shape: f32[8,1], index: 6, kind: input, shape index: {}]
  %s7 = inlined_call_operand.vmem [shape: f32[2,8,64], index: 7, kind: output, shape index: {}]
  %s8 = sld [smem:[#allocation0]]
  $region65: #{downsampling_block.1} parent=0
    _
  %s10 = ssub.s32 1, %s8
  %s11 = scalar_select 0, %s10, %s8
  $region1: #{downsampling_block.1} parent=0
    #allocation2 [shape = 'u8[512]{0}', space=smem, size = 0x200, scoped, tag = 'input window, operand 0, single buffered']
    #allocation3 [shape = 's32[2]{0}', space=sflag, size = 0x8, scoped, tag = 'scoped memory for downsampling_block.1']
    %12 = vsyncpa [#allocation3], 0
    loop: start=0, step=1, limit=4
    $region2: #{downsampling_block.1} parent=1 // loop_pre_header
      _
    $region3: #{downsampling_block.1} parent=1 // loop_header
      %s14 = sphi 0, %s18
      %p15 = scmp.ge.s32.totalorder %s14, 4
      %s22 = sphi 0, %s22
      %s24 = sphi 0, %s22
      %s25 = sphi 0, %s24
      %s39 = sphi 0, %s25
      %s45 = sphi 0, %s47
      %s48 = sphi 0, %s45
      %s49 = sphi 0, %s48
      %s65 = sphi 0, %s49
      %s69 = sphi 0, %s69
      %s71 = sphi 0, %s69
      %s72 = sphi 0, %s71
      %s86 = sphi 0, %s72
      %s90 = sphi 0, %s90
      %s92 = sphi 0, %s90
      %s93 = sphi 0, %s92
      %s107 = sphi 0, %s93
      %s111 = sphi 0, %s111
      %s113 = sphi 0, %s111
      %s114 = sphi 0, %s113
      %s128 = sphi 0, %s114
      %s132 = sphi 0, %s132
      %s134 = sphi 0, %s132
      %s135 = sphi 0, %s134
      %s149 = sphi 0, %s135
      %s153 = sphi 0, %s153
      %s155 = sphi 0, %s153
      %s156 = sphi 0, %s155
      %s170 = sphi 0, %s156
      %s176 = sphi 0, %s178
      %s179 = sphi 0, %s176
      %s180 = sphi 0, %s179
      %s196 = sphi 0, %s180
    $region4: #{downsampling_block.1} parent=1 // loop_header_branch
      %17 = sbr.rel (%p15) target = $region8
    $region5: #{downsampling_block.1} parent=1 // loop_body
      %s19 = ssub.s32 %s14, 1
      %s20 = ssub.s32 %s14, 2
      %s21 = sadd.s32 %s14, 1
      %s23 = sadd.s32 %s22, 1
      %p26 = scmp.eq.s32.totalorder %s14, 1
      %p27 = scmp.ne.s32.totalorder %s22, %s24
      %p28 = scmp.eq.s32.totalorder %s14, 0
      %p29 = por %p27, %p28
      %p30 = scmp.ne.s32.totalorder %s22, %s24
      %p31 = scmp.eq.s32.totalorder %s19, 1
      %p32 = por %p30, %p31
      %p33 = scmp.ne.s32.totalorder %s24, %s25
      %p34 = scmp.eq.s32.totalorder %s19, 0
      %p35 = por %p33, %p34
      %p36 = scmp.ne.s32.totalorder %s24, %s25
      %p37 = scmp.eq.s32.totalorder %s20, 1
      %p38 = por %p36, %p37
      %p40 = scmp.ne.s32.totalorder %s25, %s39
      %p41 = scmp.eq.s32.totalorder %s20, 0
      %p42 = por %p40, %p41
      %s43 = ssub.s32 %s14, %s21
      %p44 = scmp.eq.s32.totalorder %s43, 0
      %s46 = sadd.s32 %s45, 1
      %s47 = scalar_select %p44, %s45, %s46
      %p50 = pneg %p44
      %p51 = scmp.eq.s32.totalorder %s14, 1
      %p52 = por %p50, %p51
      %p53 = scmp.ne.s32.totalorder %s45, %s48
      %p54 = scmp.eq.s32.totalorder %s14, 0
      %p55 = por %p53, %p54
      %p56 = scmp.ne.s32.totalorder %s45, %s48
      %p57 = scmp.eq.s32.totalorder %s19, 1
      %p58 = por %p56, %p57
      %p59 = scmp.ne.s32.totalorder %s48, %s49
      %p60 = scmp.eq.s32.totalorder %s19, 0
      %p61 = por %p59, %p60
      %p62 = scmp.ne.s32.totalorder %s48, %s49
      %p63 = scmp.eq.s32.totalorder %s20, 1
      %p64 = por %p62, %p63
      %p66 = scmp.ne.s32.totalorder %s49, %s65
      %p67 = scmp.eq.s32.totalorder %s20, 0
      %p68 = por %p66, %p67
      %s70 = sadd.s32 %s69, 1
      %p73 = scmp.eq.s32.totalorder %s14, 1
      %p74 = scmp.ne.s32.totalorder %s69, %s71
      %p75 = scmp.eq.s32.totalorder %s14, 0
      %p76 = por %p74, %p75
      %p77 = scmp.ne.s32.totalorder %s69, %s71
      %p78 = scmp.eq.s32.totalorder %s19, 1
      %p79 = por %p77, %p78
      %p80 = scmp.ne.s32.totalorder %s71, %s72
      %p81 = scmp.eq.s32.totalorder %s19, 0
      %p82 = por %p80, %p81
      %p83 = scmp.ne.s32.totalorder %s71, %s72
      %p84 = scmp.eq.s32.totalorder %s20, 1
      %p85 = por %p83, %p84
      %p87 = scmp.ne.s32.totalorder %s72, %s86
      %p88 = scmp.eq.s32.totalorder %s20, 0
      %p89 = por %p87, %p88
      %s91 = sadd.s32 %s90, 1
      %p94 = scmp.eq.s32.totalorder %s14, 1
      %p95 = scmp.ne.s32.totalorder %s90, %s92
      %p96 = scmp.eq.s32.totalorder %s14, 0
      %p97 = por %p95, %p96
      %p98 = scmp.ne.s32.totalorder %s90, %s92
      %p99 = scmp.eq.s32.totalorder %s19, 1
      %p100 = por %p98, %p99
      %p101 = scmp.ne.s32.totalorder %s92, %s93
      %p102 = scmp.eq.s32.totalorder %s19, 0
      %p103 = por %p101, %p102
      %p104 = scmp.ne.s32.totalorder %s92, %s93
      %p105 = scmp.eq.s32.totalorder %s20, 1
      %p106 = por %p104, %p105
      %p108 = scmp.ne.s32.totalorder %s93, %s107
      %p109 = scmp.eq.s32.totalorder %s20, 0
      %p110 = por %p108, %p109
      %s112 = sadd.s32 %s111, 1
      %p115 = scmp.eq.s32.totalorder %s14, 1
      %p116 = scmp.ne.s32.totalorder %s111, %s113
      %p117 = scmp.eq.s32.totalorder %s14, 0
      %p118 = por %p116, %p117
      %p119 = scmp.ne.s32.totalorder %s111, %s113
      %p120 = scmp.eq.s32.totalorder %s19, 1
      %p121 = por %p119, %p120
      %p122 = scmp.ne.s32.totalorder %s113, %s114
      %p123 = scmp.eq.s32.totalorder %s19, 0
      %p124 = por %p122, %p123
      %p125 = scmp.ne.s32.totalorder %s113, %s114
      %p126 = scmp.eq.s32.totalorder %s20, 1
      %p127 = por %p125, %p126
      %p129 = scmp.ne.s32.totalorder %s114, %s128
      %p130 = scmp.eq.s32.totalorder %s20, 0
      %p131 = por %p129, %p130
      %s133 = sadd.s32 %s132, 1
      %p136 = scmp.eq.s32.totalorder %s14, 1
      %p137 = scmp.ne.s32.totalorder %s132, %s134
      %p138 = scmp.eq.s32.totalorder %s14, 0
      %p139 = por %p137, %p138
      %p140 = scmp.ne.s32.totalorder %s132, %s134
      %p141 = scmp.eq.s32.totalorder %s19, 1
      %p142 = por %p140, %p141
      %p143 = scmp.ne.s32.totalorder %s134, %s135
      %p144 = scmp.eq.s32.totalorder %s19, 0
      %p145 = por %p143, %p144
      %p146 = scmp.ne.s32.totalorder %s134, %s135
      %p147 = scmp.eq.s32.totalorder %s20, 1
      %p148 = por %p146, %p147
      %p150 = scmp.ne.s32.totalorder %s135, %s149
      %p151 = scmp.eq.s32.totalorder %s20, 0
      %p152 = por %p150, %p151
      %s154 = sadd.s32 %s153, 1
      %p157 = scmp.eq.s32.totalorder %s14, 1
      %p158 = scmp.ne.s32.totalorder %s153, %s155
      %p159 = scmp.eq.s32.totalorder %s14, 0
      %p160 = por %p158, %p159
      %p161 = scmp.ne.s32.totalorder %s153, %s155
      %p162 = scmp.eq.s32.totalorder %s19, 1
      %p163 = por %p161, %p162
      %p164 = scmp.ne.s32.totalorder %s155, %s156
      %p165 = scmp.eq.s32.totalorder %s19, 0
      %p166 = por %p164, %p165
      %p167 = scmp.ne.s32.totalorder %s155, %s156
      %p168 = scmp.eq.s32.totalorder %s20, 1
      %p169 = por %p167, %p168
      %p171 = scmp.ne.s32.totalorder %s156, %s170
      %p172 = scmp.eq.s32.totalorder %s20, 0
      %p173 = por %p171, %p172
      %s174 = ssub.s32 %s14, %s21
      %p175 = scmp.eq.s32.totalorder %s174, 0
      %s177 = sadd.s32 %s176, 1
      %s178 = scalar_select %p175, %s176, %s177
      %p181 = pneg %p175
      %p182 = scmp.eq.s32.totalorder %s14, 1
      %p183 = por %p181, %p182
      %p184 = scmp.ne.s32.totalorder %s176, %s179
      %p185 = scmp.eq.s32.totalorder %s14, 0
      %p186 = por %p184, %p185
      %p187 = scmp.ne.s32.totalorder %s176, %s179
      %p188 = scmp.eq.s32.totalorder %s19, 1
      %p189 = por %p187, %p188
      %p190 = scmp.ne.s32.totalorder %s179, %s180
      %p191 = scmp.eq.s32.totalorder %s19, 0
      %p192 = por %p190, %p191
      %p193 = scmp.ne.s32.totalorder %s179, %s180
      %p194 = scmp.eq.s32.totalorder %s20, 1
      %p195 = por %p193, %p194
      %p197 = scmp.ne.s32.totalorder %s180, %s196
      %p198 = scmp.eq.s32.totalorder %s20, 0
      %p199 = por %p197, %p198
      %p200 = scmp.le.s32.totalorder 1, %s14
      %p201 = scmp.lt.s32.totalorder %s14, 3
      %p202 = pnand %p200, %p201
      %p203 = pneg %p202
      // Predicated region
      $region9: #{downsampling_block.1} parent=5 // pred_check
        _
      $region10: #{downsampling_block.1} parent=5 // pred_check_branch
        %205 = sbr.rel (%p202) target = $region12
      $region11: #{downsampling_block.1} parent=5 // pred_region
        %s206 = ssub.s32 %s14, 1
        // Predicated region
        $region13: #{downsampling_block.1} parent=11 // pred_check
          %p207 = pneg %p35
        $region14: #{downsampling_block.1} parent=11 // pred_check_branch
          %209 = sbr.rel (%p207) target = $region16
        $region15: #{downsampling_block.1} parent=11 // pred_region
          %s211 = ssub.s32 16, 16
          %212 = vsyncadd [#allocation3], %s211
          %s214 = sshll.u32 %s0, 4
          %s215 = int_to_ptr.vmem [resolvable:$true] %s214
          %217 = dma.vmem_to_smem %s215, 16, [#allocation2], [#allocation3]
        $region16: #{downsampling_block.1} parent=11 // pred_fallthru
          _
        // Predicated region
        $region17: #{downsampling_block.1} parent=11 // pred_check
          %p218 = pneg %p82
        $region18: #{downsampling_block.1} parent=11 // pred_check_branch
          %220 = sbr.rel (%p218) target = $region20
        $region19: #{downsampling_block.1} parent=11 // pred_region
          _
        $region20: #{downsampling_block.1} parent=11 // pred_fallthru
          _
        // Predicated region
        $region21: #{downsampling_block.1} parent=11 // pred_check
          %p221 = pneg %p103
        $region22: #{downsampling_block.1} parent=11 // pred_check_branch
          %223 = sbr.rel (%p221) target = $region24
        $region23: #{downsampling_block.1} parent=11 // pred_region
          _
        $region24: #{downsampling_block.1} parent=11 // pred_fallthru
          _
        // Predicated region
        $region25: #{downsampling_block.1} parent=11 // pred_check
          %p224 = pneg %p124
        $region26: #{downsampling_block.1} parent=11 // pred_check_branch
          %226 = sbr.rel (%p224) target = $region28
        $region27: #{downsampling_block.1} parent=11 // pred_region
          _
        $region28: #{downsampling_block.1} parent=11 // pred_fallthru
          _
        // Predicated region
        $region29: #{downsampling_block.1} parent=11 // pred_check
          %p227 = pneg %p145
        $region30: #{downsampling_block.1} parent=11 // pred_check_branch
          %229 = sbr.rel (%p227) target = $region32
        $region31: #{downsampling_block.1} parent=11 // pred_region
          _
        $region32: #{downsampling_block.1} parent=11 // pred_fallthru
          _
        // Predicated region
        $region33: #{downsampling_block.1} parent=11 // pred_check
          %p230 = pneg %p166
        $region34: #{downsampling_block.1} parent=11 // pred_check_branch
          %232 = sbr.rel (%p230) target = $region36
        $region35: #{downsampling_block.1} parent=11 // pred_region
          _
        $region36: #{downsampling_block.1} parent=11 // pred_fallthru
          _
      $region12: #{downsampling_block.1} parent=5 // pred_fallthru
        _
      %p233 = scmp.lt.s32.totalorder %s14, 2
      // Predicated region
      $region37: #{downsampling_block.1} parent=5 // pred_check
        %p234 = pneg %p233
      $region38: #{downsampling_block.1} parent=5 // pred_check_branch
        %236 = sbr.rel (%p234) target = $region40
      $region39: #{downsampling_block.1} parent=5 // pred_region
        // Predicated region
        $region41: #{downsampling_block.1} parent=39 // pred_check
          %p237 = pneg %p55
        $region42: #{downsampling_block.1} parent=39 // pred_check_branch
          %239 = sbr.rel (%p237) target = $region44
        $region43: #{downsampling_block.1} parent=39 // pred_region
          %p240 = scmp.lt.s32.totalorder %s14, 1
          %s241 = scalar_select %p240, %s14, 1
          %s242 = smul.addr %s241, 2
          %s243 = smul.addr %s242, 8
          %s244 = scalar_lea.vmem %s1, %s243
        $region44: #{downsampling_block.1} parent=39 // pred_fallthru
          _
      $region40: #{downsampling_block.1} parent=5 // pred_fallthru
        _
      %p245 = scmp.le.s32.totalorder 1, %s14
      %p246 = scmp.lt.s32.totalorder %s14, 3
      %p247 = pnand %p245, %p246
      %p248 = pneg %p247
      // Predicated region
      $region45: #{downsampling_block.1} parent=5 // pred_check
        _
      $region46: #{downsampling_block.1} parent=5 // pred_check_branch
        %250 = sbr.rel (%p247) target = $region48
      $region47: #{downsampling_block.1} parent=5 // pred_region
        %s251 = ssub.s32 %s14, 1
        // Predicated region
        $region49: #{downsampling_block.1} parent=47 // pred_check
          %p252 = pneg %p35
        $region50: #{downsampling_block.1} parent=47 // pred_check_branch
          %254 = sbr.rel (%p252) target = $region52
        $region51: #{downsampling_block.1} parent=47 // pred_region
          %255 = dma.done [#allocation3], 16
        $region52: #{downsampling_block.1} parent=47 // pred_fallthru
          _
        %256 = sfence
        %p257 = pneg %p35
        %p258 = pneg %p32
        %p259 = scmp.lt.s32.totalorder %s19, 1
        %s260 = scalar_select %p259, %s19, 1
        %s261 = smul.addr %s260, 2
        %s262 = smul.addr %s261, 8
        %s263 = scalar_lea.vmem %s1, %s262
        %p264 = pneg %p61
        %p265 = pneg %p58
        %p266 = pneg %p82
        %p267 = pneg %p79
        %p268 = pneg %p103
        %p269 = pneg %p100
        %p270 = pneg %p124
        %p271 = pneg %p121
        %p272 = pneg %p145
        %p273 = pneg %p142
        %p274 = pneg %p166
        %p275 = pneg %p163
        %p276 = pneg %p192
        %p277 = pneg %p189
        %p278 = scmp.lt.s32.totalorder %s19, 1
        %s279 = scalar_select %p278, %s19, 1
        %s280 = smul.addr %s279, 8
        %s281 = scalar_lea.vmem %s7, %s280
        %p282 = scmp.lt.s32.totalorder %s19, 1
        %s283 = scalar_select %p282, %s19, 1
        %s284 = smul.addr %s283, 2
        %s285 = smul.addr %s284, 8
        %s286 = scalar_lea.vmem %s1, %s285
        %p287 = scmp.lt.s32.totalorder %s19, 1
        %s288 = scalar_select %p287, %s19, 1
        %s289 = smul.addr %s288, 8
        %s290 = scalar_lea.vmem %s7, %s289
        %s291 = sld [smem:[#allocation2]]
        %s292 = sld [smem:[#allocation2 + $0x1]]
        %v293 = vld [vmem:[%s286] sm:$0xff]
        %v294 = vld [vmem:[%s286 + $0x8] sm:$0xff]
        %vm295 = vcmp.ge.f32.partialorder %v293, 0.0
        %vm296 = vcmp.ge.f32.partialorder %v294, 0.0
        %v297 = vstv %s291
        %v298 = vmul.f32 %v297, %v293
        %v299 = vmul.f32 %v297, %v294
        %v300 = vsel %vm295, %v293, %v298
        %v301 = vsel %vm296, %v294, %v299
        %304 = vrot.lane.b32.xlu0 %v300, 9
        %v305 = vpop.permute.xlu0 %304
        %306 = vrot.lane.b32.xlu0 %v301, 9
        %v307 = vpop.permute.xlu0 %306
        %vm310 = vcmask 72704
        %v311 = vsel %vm310, 0.0, %v305
        %v312 = vsel %vm310, 0.0, %v307
        %v313 = vld [vmem:[%s2] sm:$0x1]
        %v314 = vlaneseq
        %v315 = vshrl.u32 %v314, 7
        %v316 = vsub.s32 0, %v315
        %v317 = vrot.slane %v313, %v316
        %v318 = vmul.f32 %v311, %v317
        %v319 = vmul.f32 %v312, %v317
        %320 = vrot.lane.b32.xlu0 %v300, 8
        %v321 = vpop.permute.xlu0 %320
        %322 = vrot.lane.b32.xlu0 %v301, 8
        %v323 = vpop.permute.xlu0 %322
        %vm326 = vcmask 64512
        %v327 = vsel %vm326, 0.0, %v321
        %v328 = vsel %vm326, 0.0, %v323
        %v329 = vld [vmem:[%s2 + $0x1] sm:$0x1]
        %v330 = vlaneseq
        %v331 = vshrl.u32 %v330, 7
        %v332 = vsub.s32 0, %v331
        %v333 = vrot.slane %v329, %v332
        %v334 = vmul.f32 %v327, %v333
        %v335 = vmul.f32 %v328, %v333
        %336 = vrot.lane.b32.xlu0 %v300, 1
        %v337 = vpop.permute.xlu0 %336
        %338 = vrot.lane.b32.xlu0 %v301, 1
        %v339 = vpop.permute.xlu0 %338
        %vm342 = vcmask 7168
        %v343 = vsel %vm342, 0.0, %v337
        %v344 = vsel %vm342, 0.0, %v339
        %v345 = vld [vmem:[%s2 + $0x3] sm:$0x1]
        %v346 = vlaneseq
        %v347 = vshrl.u32 %v346, 7
        %v348 = vsub.s32 0, %v347
        %v349 = vrot.slane %v345, %v348
        %v350 = vmul.f32 %v343, %v349
        %v351 = vmul.f32 %v344, %v349
        %v352 = vld [vmem:[%s3] sm:$0xff]
        %v353 = vld [vmem:[%s4] sm:$0xff]
        %355 = vset.pattern.permute.xlu0 0
        %356 = vperm.xlu0 %355, %v353
        %v357 = vpop.permute.xlu0 %356
        %vm359 = vcmask 523264
        %v361 = vsel %vm359, %v352, 0
        %363 = vmatprep.subr.mxu0 0.0
        %364 = vmatpush1.msra.mxu0 %v318
        %365 = vmatprep.subr.mxu0 0.0
        %366 = vmatpush1.msra.mxu0 %v319
        %367 = vmatprep.subr.mxu0 0.0
        %368 = vmatpush1.msra.mxu0 %v334
        %369 = vmatprep.subr.mxu0 0.0
        %370 = vmatpush1.msra.mxu0 %v335
        %371 = vmatprep.subr.mxu0 0.0
        %372 = vmatpush1.msra.mxu0 %v350
        %373 = vmatprep.subr.mxu0 0.0
        %374 = vmatpush1.msra.mxu0 %v351
        %375 = vmatprep.subr.mxu0 0.0
        %376 = vmatpush1.msra.mxu0 %v300
        %377 = vmatprep.subr.mxu0 0.0
        %378 = vmatpush1.msra.mxu0 %v301
        %379 = vmatprep.subr.mxu0 0.0
        %380 = vmatpush1.msra.mxu0 0.0
        %381 = vmatprep.subr.mxu0 0.0
        %382 = vmatpush1.msra.mxu0 0.0
        %383 = vmatprep.subr.mxu0 0.0
        %384 = vmatpush1.msra.mxu0 0.0
        %385 = vmatprep.subr.mxu0 0.0
        %386 = vmatpush1.msra.mxu0 0.0
        %387 = vmatprep.subr.mxu0 0.0
        %388 = vmatpush1.msra.mxu0 0.0
        %389 = vmatprep.subr.mxu0 0.0
        %390 = vmatpush1.msra.mxu0 0.0
        %391 = vmatprep.subr.mxu0 0.0
        %392 = vmatpush1.msra.mxu0 0.0
        %393 = vmatprep.subr.mxu0 0.0
        %394 = vmatpush1.msra.mxu0 0.0
        %395 = vmatprep.subr.mxu0 0.0
        %396 = vmatpush1.msra.mxu0 0.0
        %397 = vmatprep.subr.mxu0 0.0
        %398 = vmatpush1.msra.mxu0 0.0
        %399 = vmatprep.subr.mxu0 0.0
        %400 = vmatpush1.msra.mxu0 0.0
        %401 = vmatprep.subr.mxu0 0.0
        %402 = vmatpush1.msra.mxu0 0.0
        %403 = vmatprep.subr.mxu0 0.0
        %404 = vmatpush1.msra.mxu0 0.0
        %405 = vmatprep.subr.mxu0 0.0
        %406 = vmatpush1.msra.mxu0 0.0
        %407 = vmatprep.subr.mxu0 0.0
        %408 = vmatpush1.msra.mxu0 0.0
        %409 = vmatprep.subr.mxu0 0.0
        %410 = vmatpush1.msra.mxu0 0.0
        %411 = vmatprep.subr.mxu0 0.0
        %412 = vmatpush1.msra.mxu0 0.0
        %413 = vmatprep.subr.mxu0 0.0
        %414 = vmatpush1.msra.mxu0 0.0
        %415 = vmatprep.subr.mxu0 0.0
        %416 = vmatpush1.msra.mxu0 0.0
        %417 = vmatprep.subr.mxu0 0.0
        %418 = vmatpush1.msra.mxu0 0.0
        %419 = vmatprep.subr.mxu0 0.0
        %420 = vmatpush1.msra.mxu0 0.0
        %421 = vmatprep.subr.mxu0 0.0
        %422 = vmatpush1.msra.mxu0 0.0
        %423 = vmatprep.subr.mxu0 0.0
        %424 = vmatpush1.msra.mxu0 0.0
        %425 = vmatprep.subr.mxu0 0.0
        %426 = vmatpush1.msra.mxu0 0.0
        %427 = vmatprep.mubr.f32.mxu0 0.0
        %428 = vmatmul.mubr.f32.gmra.mrb[0].mxu0 %v361
        %v429 = vpop.f32.mrb[0].mxu0
        %v430 = vadd.f32 %v357, %v429
        %v431 = vpop.f32.mrb[0].mxu0
        %432 = vdwg.mxu0
        %vm433 = vcmp.ge.f32.partialorder %v430, 0.0
        %v434 = vstv %s292
        %v435 = vmul.f32 %v434, %v430
        %v436 = vsel %vm433, %v430, %v435
        %438 = vrot.lane.b32.xlu0 %v436, 9
        %v439 = vpop.permute.xlu0 %438
        %v441 = vsel %vm310, 0.0, %v439
        %v442 = vmul.f32 %v441, %v317
        %443 = vrot.lane.b32.xlu0 %v436, 8
        %v444 = vpop.permute.xlu0 %443
        %v446 = vsel %vm326, 0.0, %v444
        %v447 = vmul.f32 %v446, %v333
        %448 = vrot.lane.b32.xlu0 %v436, 7
        %v449 = vpop.permute.xlu0 %448
        %vm451 = vcmask 56320
        %v452 = vsel %vm451, 0.0, %v449
        %v453 = vld [vmem:[%s2 + $0x2] sm:$0x1]
        %v454 = vlaneseq
        %v455 = vshrl.u32 %v454, 7
        %v456 = vsub.s32 0, %v455
        %v457 = vrot.slane %v453, %v456
        %v458 = vmul.f32 %v452, %v457
        %459 = vrot.lane.b32.xlu0 %v436, 1
        %v460 = vpop.permute.xlu0 %459
        %v462 = vsel %vm342, 0.0, %v460
        %v463 = vmul.f32 %v462, %v349
        %464 = vrot.lane.b32.xlu0 %v436, 127
        %v465 = vpop.permute.xlu0 %464
        %vm467 = vcmask 515072
        %v468 = vsel %vm467, %v465, 0.0
        %v469 = vld [vmem:[%s2 + $0x5] sm:$0x1]
        %v470 = vlaneseq
        %v471 = vshrl.u32 %v470, 7
        %v472 = vsub.s32 0, %v471
        %v473 = vrot.slane %v469, %v472
        %v474 = vmul.f32 %v468, %v473
        %475 = vrot.lane.b32.xlu0 %v436, 121
        %v476 = vpop.permute.xlu0 %475
        %vm478 = vcmask 465920
        %v479 = vsel %vm478, %v476, 0.0
        %v480 = vld [vmem:[%s2 + $0x6] sm:$0x1]
        %v481 = vlaneseq
        %v482 = vshrl.u32 %v481, 7
        %v483 = vsub.s32 0, %v482
        %v484 = vrot.slane %v480, %v483
        %v485 = vmul.f32 %v479, %v484
        %486 = vrot.lane.b32.xlu0 %v436, 120
        %v487 = vpop.permute.xlu0 %486
        %vm489 = vcmask 457728
        %v490 = vsel %vm489, %v487, 0.0
        %v491 = vld [vmem:[%s2 + $0x7] sm:$0x1]
        %v492 = vlaneseq
        %v493 = vshrl.u32 %v492, 7
        %v494 = vsub.s32 0, %v493
        %v495 = vrot.slane %v491, %v494
        %v496 = vmul.f32 %v490, %v495
        %497 = vrot.lane.b32.xlu0 %v436, 119
        %v498 = vpop.permute.xlu0 %497
        %vm500 = vcmask 449536
        %v501 = vsel %vm500, %v498, 0.0
        %v502 = vld [vmem:[%s2 + $0x8] sm:$0x1]
        %v503 = vlaneseq
        %v504 = vshrl.u32 %v503, 7
        %v505 = vsub.s32 0, %v504
        %v506 = vrot.slane %v502, %v505
        %v507 = vmul.f32 %v501, %v506
        %v508 = vld [vmem:[%s5] sm:$0xff]
        %v509 = vld [vmem:[%s6] sm:$0xff]
        %511 = vset.pattern.permute.xlu0 0
        %512 = vperm.xlu0 %511, %v509
        %v513 = vpop.permute.xlu0 %512
        %vm515 = vcmask 588800
        %v517 = vsel %vm515, %v508, 0
        %519 = vmatprep.subr.mxu0 0.0
        %520 = vmatpush1.msra.mxu0 %v442
        %521 = vmatprep.subr.mxu0 0.0
        %522 = vmatpush1.msra.mxu0 %v447
        %523 = vmatprep.subr.mxu0 0.0
        %524 = vmatpush1.msra.mxu0 %v458
        %525 = vmatprep.subr.mxu0 0.0
        %526 = vmatpush1.msra.mxu0 %v463
        %527 = vmatprep.subr.mxu0 0.0
        %528 = vmatpush1.msra.mxu0 %v436
        %529 = vmatprep.subr.mxu0 0.0
        %530 = vmatpush1.msra.mxu0 %v474
        %531 = vmatprep.subr.mxu0 0.0
        %532 = vmatpush1.msra.mxu0 %v485
        %533 = vmatprep.subr.mxu0 0.0
        %534 = vmatpush1.msra.mxu0 %v496
        %535 = vmatprep.subr.mxu0 0.0
        %536 = vmatpush1.msra.mxu0 %v507
        %537 = vmatprep.subr.mxu0 0.0
        %538 = vmatpush1.msra.mxu0 0.0
        %539 = vmatprep.subr.mxu0 0.0
        %540 = vmatpush1.msra.mxu0 0.0
        %541 = vmatprep.subr.mxu0 0.0
        %542 = vmatpush1.msra.mxu0 0.0
        %543 = vmatprep.subr.mxu0 0.0
        %544 = vmatpush1.msra.mxu0 0.0
        %545 = vmatprep.subr.mxu0 0.0
        %546 = vmatpush1.msra.mxu0 0.0
        %547 = vmatprep.subr.mxu0 0.0
        %548 = vmatpush1.msra.mxu0 0.0
        %549 = vmatprep.subr.mxu0 0.0
        %550 = vmatpush1.msra.mxu0 0.0
        %551 = vmatprep.subr.mxu0 0.0
        %552 = vmatpush1.msra.mxu0 0.0
        %553 = vmatprep.subr.mxu0 0.0
        %554 = vmatpush1.msra.mxu0 0.0
        %555 = vmatprep.subr.mxu0 0.0
        %556 = vmatpush1.msra.mxu0 0.0
        %557 = vmatprep.subr.mxu0 0.0
        %558 = vmatpush1.msra.mxu0 0.0
        %559 = vmatprep.subr.mxu0 0.0
        %560 = vmatpush1.msra.mxu0 0.0
        %561 = vmatprep.subr.mxu0 0.0
        %562 = vmatpush1.msra.mxu0 0.0
        %563 = vmatprep.subr.mxu0 0.0
        %564 = vmatpush1.msra.mxu0 0.0
        %565 = vmatprep.subr.mxu0 0.0
        %566 = vmatpush1.msra.mxu0 0.0
        %567 = vmatprep.subr.mxu0 0.0
        %568 = vmatpush1.msra.mxu0 0.0
        %569 = vmatprep.subr.mxu0 0.0
        %570 = vmatpush1.msra.mxu0 0.0
        %571 = vmatprep.subr.mxu0 0.0
        %572 = vmatpush1.msra.mxu0 0.0
        %573 = vmatprep.subr.mxu0 0.0
        %574 = vmatpush1.msra.mxu0 0.0
        %575 = vmatprep.subr.mxu0 0.0
        %576 = vmatpush1.msra.mxu0 0.0
        %577 = vmatprep.subr.mxu0 0.0
        %578 = vmatpush1.msra.mxu0 0.0
        %579 = vmatprep.subr.mxu0 0.0
        %580 = vmatpush1.msra.mxu0 0.0
        %581 = vmatprep.subr.mxu0 0.0
        %582 = vmatpush1.msra.mxu0 0.0
        %583 = vmatprep.mubr.f32.mxu0 0.0
        %584 = vmatmul.mubr.f32.gmra.mrb[0].mxu0 %v517
        %v585 = vpop.f32.mrb[0].mxu0
        %v586 = vadd.f32 %v513, %v585
        %v587 = vpop.f32.mrb[0].mxu0
        %588 = vdwg.mxu0
        %589 = vst.msk [vmem:[%s290] sm:$0xff] %vm359, %v586
        %p590 = scmp.lt.s32.totalorder %s19, 1
        %s591 = scalar_select %p590, %s19, 1
        %s592 = smul.addr %s591, 8
        %s593 = scalar_lea.vmem %s7, %s592
        // Predicated region
        $region53: #{downsampling_block.1} parent=47 // pred_check
          %p594 = pneg %p189
        $region54: #{downsampling_block.1} parent=47 // pred_check_branch
          %596 = sbr.rel (%p594) target = $region56
        $region55: #{downsampling_block.1} parent=47 // pred_region
          _
        $region56: #{downsampling_block.1} parent=47 // pred_fallthru
          _
      $region48: #{downsampling_block.1} parent=5 // pred_fallthru
        _
      %p597 = scmp.le.s32.totalorder 2, %s14
      // Predicated region
      $region57: #{downsampling_block.1} parent=5 // pred_check
        %p598 = pneg %p597
      $region58: #{downsampling_block.1} parent=5 // pred_check_branch
        %600 = sbr.rel (%p598) target = $region60
      $region59: #{downsampling_block.1} parent=5 // pred_region
        %s601 = ssub.s32 %s14, 2
        // Predicated region
        $region61: #{downsampling_block.1} parent=59 // pred_check
          %p602 = pneg %p195
        $region62: #{downsampling_block.1} parent=59 // pred_check_branch
          %604 = sbr.rel (%p602) target = $region64
        $region63: #{downsampling_block.1} parent=59 // pred_region
          %p605 = scmp.lt.s32.totalorder %s20, 1
          %s606 = scalar_select %p605, %s20, 1
          %s607 = smul.addr %s606, 8
          %s608 = scalar_lea.vmem %s7, %s607
        $region64: #{downsampling_block.1} parent=59 // pred_fallthru
          _
      $region60: #{downsampling_block.1} parent=5 // pred_fallthru
        _
    $region6: #{downsampling_block.1} parent=1 // loop_footer
      %s18 = sadd.s32 1, %s14
    $region7: #{downsampling_block.1} parent=1 // loop_footer_branch
      %13 = sbr.rel target = $region3
    $region8: #{downsampling_block.1} parent=1 // loop_exit
      _
    %609 = vsyncpa [#allocation3], 1
    %s610 = scalar_lea.sflag [#allocation3], 1
    %611 = vsyncpa %s610, 1

</llo_original>
